<compile_context>
chip_gen: v5e
topology: v5e:2x2
jax: 0.10.0
libtpu: 0.0.40
codegen_flags: <defaults>
</compile_context>

<pallas_src>
import functools

import jax
import jax.numpy as jnp
import numpy as np
from jax import lax
from jax.experimental import pallas as pl
from jax.experimental.pallas import tpu as pltpu

EPS = 1e-16


def _dtw_logic_kernel(x_ref, u_ref, ub_ref, m_ref, out_ref, dist_ref,
                      *, n_steps, seq_l, feat_d, kg, n_groups, out_pad):
    """One batch row per grid step.

    x_ref    : (1, N, D)     input sequence for this batch row
    u_ref    : (M, 1)        per-prototype input scale  (module's `u`)
    ub_ref   : (M, 1)        per-prototype input bias   (module's `u_bias`)
    m_ref    : (M, L*D)      prototypes, lane-dense, EPS already folded in
    out_ref  : (1, 1, out_pad) padded output row; first n_groups lanes valid
    dist_ref : (N, M, L)     VMEM scratch holding all per-step L1 distances
    """
    N, L, D = n_steps, seq_l, feat_d
    M = m_ref.shape[0]

    xv = x_ref[0]                      # (N, D)
    u = u_ref[...]                     # (M, 1)
    ub = ub_ref[...]                   # (M, 1)
    m_flat = m_ref[...]                # (M, L*D)

    # ---- all time steps at once (distances do not depend on the recurrence) --
    # x_t[n, m, d] = x[n, d] * u[m] + u_bias[m]
    xt = xv[:, None, :] * u[None, :, :] + ub[None, :, :]          # (N, M, D)
    # Replicate along L so the working tensor is lane-dense (L*D = 128 here).
    xt_rep = jnp.concatenate([xt] * L, axis=2)                    # (N, M, L*D)
    absdiff = jnp.abs(m_flat[None, :, :] - xt_rep)                # (N, M, L*D)
    # Segmented sum over D for each l via static lane slices (no relayouts).
    dist_cols = [
        jnp.sum(absdiff[:, :, l * D:(l + 1) * D], axis=2, keepdims=True)
        for l in range(L)
    ]
    dist_ref[...] = jnp.concatenate(dist_cols, axis=2)            # (N, M, L)

    # ---- sequential DTW recurrence over time (s carried in vregs) -----------
    inf_col = jnp.full((M, 1), jnp.inf, jnp.float32)
    s0 = jnp.concatenate(                                          # init_hidden
        [jnp.zeros((M, 1), jnp.float32),
         jnp.full((M, L - 1), jnp.inf, jnp.float32)], axis=1)      # (M, L)

    def step(t, s):
        d_t = dist_ref[t]                                          # (M, L)
        # s_prev[l] = min(s[l-1] (inf at l == 0), s[l])
        s_shift = jnp.concatenate([inf_col, s[:, :L - 1]], axis=1)
        return d_t + jnp.minimum(s_shift, s)

    s_final = lax.fori_loop(0, N, step, s0, unroll=True)

    # ---- fused Logic head: softmax(-o) then block-diagonal group sums -------
    logits = -s_final[:, L - 1:L]                                  # (M, 1)
    mx = jnp.max(logits, axis=0, keepdims=True)
    e = jnp.exp(logits - mx)
    p = e * pl.reciprocal(jnp.sum(e, axis=0, keepdims=True), approx=True)
    parts = [
        jnp.sum(p[g * kg:(g + 1) * kg, :], axis=0, keepdims=True)  # (1, 1)
        for g in range(n_groups)
    ]
    pad = jnp.zeros((1, out_pad - n_groups), jnp.float32)
    out_ref[0] = jnp.concatenate(parts + [pad], axis=1)            # (1, out_pad)


def dtw_rnn_forward(x, u, u_bias, prototypes, k_shot, k_add):
    """x: (B, N, D) float32.  Returns (B, G) float32 (the Logic head output)."""
    B, N, D = x.shape
    M, L, _ = prototypes.shape
    kg = k_shot + k_add
    G = M // kg
    if N < L - 1:
        raise ValueError(
            f"need N >= L-1 (got N={N}, L={L}); otherwise the last DTW column "
            "is still +inf and the softmax head would produce NaNs")

    out_pad = ((G + 127) // 128) * 128        # lane-dense padded output width

    # Host-side, one-time parameter massaging:
    #   * fold EPS into prototypes and flatten (L, D) into the lane dim
    #   * reshape u / u_bias to (M, 1) so they broadcast without relayouts
    m_flat = (prototypes.astype(jnp.float32) + EPS).reshape(M, L * D)
    u_col = u.astype(jnp.float32).reshape(M, 1)
    ub_col = u_bias.astype(jnp.float32).reshape(M, 1)

    kernel = functools.partial(
        _dtw_logic_kernel, n_steps=N, seq_l=L, feat_d=D, kg=kg,
        n_groups=G, out_pad=out_pad)

    grid_spec = pltpu.PrefetchScalarGridSpec(
        num_scalar_prefetch=0,
        grid=(B,),                                           # batch only; time is in-kernel
        in_specs=[
            pl.BlockSpec((1, N, D), lambda i: (i, 0, 0)),    # x row (no transpose)
            pl.BlockSpec((M, 1), lambda i: (0, 0)),          # u
            pl.BlockSpec((M, 1), lambda i: (0, 0)),          # u_bias
            pl.BlockSpec((M, L * D), lambda i: (0, 0)),      # prototypes (+EPS)
        ],
        out_specs=pl.BlockSpec((1, 1, out_pad), lambda i: (i, 0, 0)),
        scratch_shapes=[pltpu.VMEM((N, M, L), jnp.float32)],
    )

    out_padded = pl.pallas_call(
        kernel,
        out_shape=jax.ShapeDtypeStruct((B, 1, out_pad), jnp.float32),
        grid_spec=grid_spec,
        compiler_params=pltpu.CompilerParams(
            dimension_semantics=("parallel",)),              # batch rows -> both v7x TCs
    )(x.astype(jnp.float32), u_col, ub_col, m_flat)

    return out_padded[:, 0, :G]


def reference(x, u, u_bias, m, one):
    """Plain-JAX replica of the DTW_RNN Model.forward (incl. Logic head)."""
    B, N, D = x.shape
    M, L, _ = m.shape
    s = jnp.concatenate(
        [jnp.zeros((M, 1), jnp.float32),
         jnp.full((M, L - 1), jnp.inf, jnp.float32)], axis=1)
    s = jnp.broadcast_to(s, (B, M, L))
    for i in range(N):
        xi = x[:, i, :]                                   # (B, D)
        xt = xi[:, :, None] * u + u_bias                  # (B, D, M)
        xt_ = jnp.transpose(xt, (0, 2, 1))                # (B, M, D)
        dist = jnp.sum(jnp.abs(m[None] - xt_[:, :, None, :] + EPS), axis=-1)
        padded = jnp.concatenate(
            [jnp.full((B, M, 1), jnp.inf, jnp.float32), s], axis=-1)
        s_prev = jnp.minimum(padded[..., :-1], padded[..., 1:])
        s = dist + s_prev
    o_t = s[:, :, -1]
    t = jax.nn.softmax(-o_t, axis=1)
    return t @ one


if __name__ == "__main__":
    # Small shapes consistent with the module: prototypes (M, L, D), x (B, N, D).
    k_shot, k_add = 2, 1
    M, L, D = 6, 8, 16          # M is a multiple of (k_shot + k_add); L*D = 128
    B, N = 2, 8                 # N >= L-1 so the DTW path reaches column L-1

    key = jax.random.PRNGKey(0)
    k_proto, k_x = jax.random.split(key)

    prototypes = jax.random.normal(k_proto, (M, L, D), dtype=jnp.float32)
    x = jax.random.normal(k_x, (B, N, D), dtype=jnp.float32)

    # Parameters exactly as in DTW_RNN.__init__ (u = ones, u_bias = zeros).
    u = jnp.ones((1, M), dtype=jnp.float32)
    u_bias = jnp.zeros((1, M), dtype=jnp.float32)

    out = dtw_rnn_forward(x, u, u_bias, prototypes, k_shot, k_add)
    out = jax.block_until_ready(out)

    # Reference needs the explicit block-diagonal indicator from Logic.init_variable.
    G = M // (k_shot + k_add)
    one = np.zeros((M, G), dtype=np.float32)
    for g in range(G):
        one[g * (k_shot + k_add):(g + 1) * (k_shot + k_add), g] = 1.0
    ref = reference(x, u, u_bias, prototypes, jnp.asarray(one))

    # Loose-ish rtol: pl.reciprocal(approx=True) trades <~0.4% relative error
    # in the softmax normalisation for the otherwise-idle EUP slot.
    np.testing.assert_allclose(np.asarray(out), np.asarray(ref),
                               rtol=1e-2, atol=1e-3)
    print("KERNEL_OK")
</pallas_src>

<mosaic_0001>
module attributes {stable_mosaic.version = 11 : i64} {
  func.func @_dtw_logic_kernel(%arg0: i32, %arg1: memref<1x8x16xf32, #tpu.memory_space<vmem>>, %arg2: memref<6x1xf32, #tpu.memory_space<vmem>>, %arg3: memref<6x1xf32, #tpu.memory_space<vmem>>, %arg4: memref<6x128xf32, #tpu.memory_space<vmem>>, %arg5: memref<1x1x128xf32, #tpu.memory_space<vmem>>, %arg6: memref<8x6x8xf32, #tpu.memory_space<vmem>>) attributes {dimension_semantics = [#tpu.dimension_semantics<parallel>], iteration_bounds = array<i64: 2>, scalar_prefetch = 0 : i64, scratch_operands = 1 : i64, tpu.core_type = #tpu.core_type<tc>, window_params = [{transform_indices = @transform_0, window_bounds = array<i64: 1, 8, 16>}, {pipeline_mode = #tpu.pipeline_mode<synchronous>, transform_indices = @transform_1, window_bounds = array<i64: 6, 1>}, {pipeline_mode = #tpu.pipeline_mode<synchronous>, transform_indices = @transform_2, window_bounds = array<i64: 6, 1>}, {pipeline_mode = #tpu.pipeline_mode<synchronous>, transform_indices = @transform_3, window_bounds = array<i64: 6, 128>}, {transform_indices = @transform_4, window_bounds = array<i64: 1, 1, 128>}]} {
    %c0 = arith.constant 0 : index
    %c0_0 = arith.constant 0 : index
    %c0_1 = arith.constant 0 : index
    %0 = vector.load %arg1[%c0, %c0_0, %c0_1] : memref<1x8x16xf32, #tpu.memory_space<vmem>>, vector<1x8x16xf32>
    %1 = vector.shape_cast %0 : vector<1x8x16xf32> to vector<8x16xf32>
    %c0_2 = arith.constant 0 : index
    %c0_3 = arith.constant 0 : index
    %2 = vector.load %arg2[%c0_2, %c0_3] : memref<6x1xf32, #tpu.memory_space<vmem>>, vector<6x1xf32>
    %c0_4 = arith.constant 0 : index
    %c0_5 = arith.constant 0 : index
    %3 = vector.load %arg3[%c0_4, %c0_5] : memref<6x1xf32, #tpu.memory_space<vmem>>, vector<6x1xf32>
    %c0_6 = arith.constant 0 : index
    %c0_7 = arith.constant 0 : index
    %4 = vector.load %arg4[%c0_6, %c0_7] : memref<6x128xf32, #tpu.memory_space<vmem>>, vector<6x128xf32>
    %5 = vector.shape_cast %1 : vector<8x16xf32> to vector<8x1x16xf32>
    %6 = vector.shape_cast %2 : vector<6x1xf32> to vector<1x6x1xf32>
    %7 = vector.broadcast %5 : vector<8x1x16xf32> to vector<8x6x16xf32>
    %8 = vector.broadcast %6 : vector<1x6x1xf32> to vector<8x6x16xf32>
    %9 = arith.mulf %7, %8 : vector<8x6x16xf32>
    %10 = vector.shape_cast %3 : vector<6x1xf32> to vector<1x6x1xf32>
    %11 = vector.broadcast %10 : vector<1x6x1xf32> to vector<8x6x16xf32>
    %12 = arith.addf %9, %11 : vector<8x6x16xf32>
    %13 = tpu.concatenate %12, %12, %12, %12, %12, %12, %12, %12 in 2 : vector<8x6x16xf32>, vector<8x6x16xf32>, vector<8x6x16xf32>, vector<8x6x16xf32>, vector<8x6x16xf32>, vector<8x6x16xf32>, vector<8x6x16xf32>, vector<8x6x16xf32> -> vector<8x6x128xf32>
    %14 = vector.shape_cast %4 : vector<6x128xf32> to vector<1x6x128xf32>
    %15 = vector.broadcast %14 : vector<1x6x128xf32> to vector<8x6x128xf32>
    %16 = arith.subf %15, %13 : vector<8x6x128xf32>
    %17 = math.absf %16 : vector<8x6x128xf32>
    %18 = vector.extract_strided_slice %17 {offsets = [0, 0, 0], sizes = [8, 6, 16], strides = [1, 1, 1]} : vector<8x6x128xf32> to vector<8x6x16xf32>
    %cst = arith.constant dense<0.000000e+00> : vector<8x6xf32>
    %19 = vector.multi_reduction <add>, %18, %cst [2] : vector<8x6x16xf32> to vector<8x6xf32>
    %20 = vector.shape_cast %19 : vector<8x6xf32> to vector<8x6x1xf32>
    %21 = vector.extract_strided_slice %17 {offsets = [0, 0, 16], sizes = [8, 6, 16], strides = [1, 1, 1]} : vector<8x6x128xf32> to vector<8x6x16xf32>
    %cst_8 = arith.constant dense<0.000000e+00> : vector<8x6xf32>
    %22 = vector.multi_reduction <add>, %21, %cst_8 [2] : vector<8x6x16xf32> to vector<8x6xf32>
    %23 = vector.shape_cast %22 : vector<8x6xf32> to vector<8x6x1xf32>
    %24 = vector.extract_strided_slice %17 {offsets = [0, 0, 32], sizes = [8, 6, 16], strides = [1, 1, 1]} : vector<8x6x128xf32> to vector<8x6x16xf32>
    %cst_9 = arith.constant dense<0.000000e+00> : vector<8x6xf32>
    %25 = vector.multi_reduction <add>, %24, %cst_9 [2] : vector<8x6x16xf32> to vector<8x6xf32>
    %26 = vector.shape_cast %25 : vector<8x6xf32> to vector<8x6x1xf32>
    %27 = vector.extract_strided_slice %17 {offsets = [0, 0, 48], sizes = [8, 6, 16], strides = [1, 1, 1]} : vector<8x6x128xf32> to vector<8x6x16xf32>
    %cst_10 = arith.constant dense<0.000000e+00> : vector<8x6xf32>
    %28 = vector.multi_reduction <add>, %27, %cst_10 [2] : vector<8x6x16xf32> to vector<8x6xf32>
    %29 = vector.shape_cast %28 : vector<8x6xf32> to vector<8x6x1xf32>
    %30 = vector.extract_strided_slice %17 {offsets = [0, 0, 64], sizes = [8, 6, 16], strides = [1, 1, 1]} : vector<8x6x128xf32> to vector<8x6x16xf32>
    %cst_11 = arith.constant dense<0.000000e+00> : vector<8x6xf32>
    %31 = vector.multi_reduction <add>, %30, %cst_11 [2] : vector<8x6x16xf32> to vector<8x6xf32>
    %32 = vector.shape_cast %31 : vector<8x6xf32> to vector<8x6x1xf32>
    %33 = vector.extract_strided_slice %17 {offsets = [0, 0, 80], sizes = [8, 6, 16], strides = [1, 1, 1]} : vector<8x6x128xf32> to vector<8x6x16xf32>
    %cst_12 = arith.constant dense<0.000000e+00> : vector<8x6xf32>
    %34 = vector.multi_reduction <add>, %33, %cst_12 [2] : vector<8x6x16xf32> to vector<8x6xf32>
    %35 = vector.shape_cast %34 : vector<8x6xf32> to vector<8x6x1xf32>
    %36 = vector.extract_strided_slice %17 {offsets = [0, 0, 96], sizes = [8, 6, 16], strides = [1, 1, 1]} : vector<8x6x128xf32> to vector<8x6x16xf32>
    %cst_13 = arith.constant dense<0.000000e+00> : vector<8x6xf32>
    %37 = vector.multi_reduction <add>, %36, %cst_13 [2] : vector<8x6x16xf32> to vector<8x6xf32>
    %38 = vector.shape_cast %37 : vector<8x6xf32> to vector<8x6x1xf32>
    %39 = vector.extract_strided_slice %17 {offsets = [0, 0, 112], sizes = [8, 6, 16], strides = [1, 1, 1]} : vector<8x6x128xf32> to vector<8x6x16xf32>
    %cst_14 = arith.constant dense<0.000000e+00> : vector<8x6xf32>
    %40 = vector.multi_reduction <add>, %39, %cst_14 [2] : vector<8x6x16xf32> to vector<8x6xf32>
    %41 = vector.shape_cast %40 : vector<8x6xf32> to vector<8x6x1xf32>
    %42 = tpu.concatenate %20, %23, %26, %29, %32, %35, %38, %41 in 2 : vector<8x6x1xf32>, vector<8x6x1xf32>, vector<8x6x1xf32>, vector<8x6x1xf32>, vector<8x6x1xf32>, vector<8x6x1xf32>, vector<8x6x1xf32>, vector<8x6x1xf32> -> vector<8x6x8xf32>
    %c0_15 = arith.constant 0 : index
    %c0_16 = arith.constant 0 : index
    %c0_17 = arith.constant 0 : index
    %43 = vector.load %arg6[%c0_15, %c0_16, %c0_17] : memref<8x6x8xf32, #tpu.memory_space<vmem>>, vector<8x6x8xf32>
    tpu.vector_store %arg6[%c0_15, %c0_16, %c0_17], %42 {strides = array<i32>} : memref<8x6x8xf32, #tpu.memory_space<vmem>>, vector<8x6x8xf32>,
    %cst_18 = arith.constant 0x7F800000 : f32
    %44 = vector.broadcast %cst_18 : f32 to vector<6x1xf32>
    %cst_19 = arith.constant 0.000000e+00 : f32
    %45 = vector.broadcast %cst_19 : f32 to vector<6x1xf32>
    %cst_20 = arith.constant 0x7F800000 : f32
    %46 = vector.broadcast %cst_20 : f32 to vector<6x7xf32>
    %47 = tpu.concatenate %45, %46 in 1 : vector<6x1xf32>, vector<6x7xf32> -> vector<6x8xf32>
    %c0_i32 = arith.constant 0 : i32
    %48 = arith.index_cast %c0_i32 : i32 to index
    %c0_21 = arith.constant 0 : index
    %c0_22 = arith.constant 0 : index
    %49 = vector.load %arg6[%48, %c0_21, %c0_22] : memref<8x6x8xf32, #tpu.memory_space<vmem>>, vector<1x6x8xf32>
    %50 = vector.shape_cast %49 : vector<1x6x8xf32> to vector<6x8xf32>
    %51 = vector.extract_strided_slice %47 {offsets = [0, 0], sizes = [6, 7], strides = [1, 1]} : vector<6x8xf32> to vector<6x7xf32>
    %52 = tpu.concatenate %44, %51 in 1 : vector<6x1xf32>, vector<6x7xf32> -> vector<6x8xf32>
    %53 = arith.minimumf %52, %47 : vector<6x8xf32>
    %54 = arith.addf %50, %53 : vector<6x8xf32>
    %c1_i32 = arith.constant 1 : i32
    %55 = arith.index_cast %c1_i32 : i32 to index
    %c0_23 = arith.constant 0 : index
    %c0_24 = arith.constant 0 : index
    %56 = vector.load %arg6[%55, %c0_23, %c0_24] : memref<8x6x8xf32, #tpu.memory_space<vmem>>, vector<1x6x8xf32>
    %57 = vector.shape_cast %56 : vector<1x6x8xf32> to vector<6x8xf32>
    %58 = vector.extract_strided_slice %54 {offsets = [0, 0], sizes = [6, 7], strides = [1, 1]} : vector<6x8xf32> to vector<6x7xf32>
    %59 = tpu.concatenate %44, %58 in 1 : vector<6x1xf32>, vector<6x7xf32> -> vector<6x8xf32>
    %60 = arith.minimumf %59, %54 : vector<6x8xf32>
    %61 = arith.addf %57, %60 : vector<6x8xf32>
    %c2_i32 = arith.constant 2 : i32
    %62 = arith.index_cast %c2_i32 : i32 to index
    %c0_25 = arith.constant 0 : index
    %c0_26 = arith.constant 0 : index
    %63 = vector.load %arg6[%62, %c0_25, %c0_26] : memref<8x6x8xf32, #tpu.memory_space<vmem>>, vector<1x6x8xf32>
    %64 = vector.shape_cast %63 : vector<1x6x8xf32> to vector<6x8xf32>
    %65 = vector.extract_strided_slice %61 {offsets = [0, 0], sizes = [6, 7], strides = [1, 1]} : vector<6x8xf32> to vector<6x7xf32>
    %66 = tpu.concatenate %44, %65 in 1 : vector<6x1xf32>, vector<6x7xf32> -> vector<6x8xf32>
    %67 = arith.minimumf %66, %61 : vector<6x8xf32>
    %68 = arith.addf %64, %67 : vector<6x8xf32>
    %c3_i32 = arith.constant 3 : i32
    %69 = arith.index_cast %c3_i32 : i32 to index
    %c0_27 = arith.constant 0 : index
    %c0_28 = arith.constant 0 : index
    %70 = vector.load %arg6[%69, %c0_27, %c0_28] : memref<8x6x8xf32, #tpu.memory_space<vmem>>, vector<1x6x8xf32>
    %71 = vector.shape_cast %70 : vector<1x6x8xf32> to vector<6x8xf32>
    %72 = vector.extract_strided_slice %68 {offsets = [0, 0], sizes = [6, 7], strides = [1, 1]} : vector<6x8xf32> to vector<6x7xf32>
    %73 = tpu.concatenate %44, %72 in 1 : vector<6x1xf32>, vector<6x7xf32> -> vector<6x8xf32>
    %74 = arith.minimumf %73, %68 : vector<6x8xf32>
    %75 = arith.addf %71, %74 : vector<6x8xf32>
    %c4_i32 = arith.constant 4 : i32
    %76 = arith.index_cast %c4_i32 : i32 to index
    %c0_29 = arith.constant 0 : index
    %c0_30 = arith.constant 0 : index
    %77 = vector.load %arg6[%76, %c0_29, %c0_30] : memref<8x6x8xf32, #tpu.memory_space<vmem>>, vector<1x6x8xf32>
    %78 = vector.shape_cast %77 : vector<1x6x8xf32> to vector<6x8xf32>
    %79 = vector.extract_strided_slice %75 {offsets = [0, 0], sizes = [6, 7], strides = [1, 1]} : vector<6x8xf32> to vector<6x7xf32>
    %80 = tpu.concatenate %44, %79 in 1 : vector<6x1xf32>, vector<6x7xf32> -> vector<6x8xf32>
    %81 = arith.minimumf %80, %75 : vector<6x8xf32>
    %82 = arith.addf %78, %81 : vector<6x8xf32>
    %c5_i32 = arith.constant 5 : i32
    %83 = arith.index_cast %c5_i32 : i32 to index
    %c0_31 = arith.constant 0 : index
    %c0_32 = arith.constant 0 : index
    %84 = vector.load %arg6[%83, %c0_31, %c0_32] : memref<8x6x8xf32, #tpu.memory_space<vmem>>, vector<1x6x8xf32>
    %85 = vector.shape_cast %84 : vector<1x6x8xf32> to vector<6x8xf32>
    %86 = vector.extract_strided_slice %82 {offsets = [0, 0], sizes = [6, 7], strides = [1, 1]} : vector<6x8xf32> to vector<6x7xf32>
    %87 = tpu.concatenate %44, %86 in 1 : vector<6x1xf32>, vector<6x7xf32> -> vector<6x8xf32>
    %88 = arith.minimumf %87, %82 : vector<6x8xf32>
    %89 = arith.addf %85, %88 : vector<6x8xf32>
    %c6_i32 = arith.constant 6 : i32
    %90 = arith.index_cast %c6_i32 : i32 to index
    %c0_33 = arith.constant 0 : index
    %c0_34 = arith.constant 0 : index
    %91 = vector.load %arg6[%90, %c0_33, %c0_34] : memref<8x6x8xf32, #tpu.memory_space<vmem>>, vector<1x6x8xf32>
    %92 = vector.shape_cast %91 : vector<1x6x8xf32> to vector<6x8xf32>
    %93 = vector.extract_strided_slice %89 {offsets = [0, 0], sizes = [6, 7], strides = [1, 1]} : vector<6x8xf32> to vector<6x7xf32>
    %94 = tpu.concatenate %44, %93 in 1 : vector<6x1xf32>, vector<6x7xf32> -> vector<6x8xf32>
    %95 = arith.minimumf %94, %89 : vector<6x8xf32>
    %96 = arith.addf %92, %95 : vector<6x8xf32>
    %c7_i32 = arith.constant 7 : i32
    %97 = arith.index_cast %c7_i32 : i32 to index
    %c0_35 = arith.constant 0 : index
    %c0_36 = arith.constant 0 : index
    %98 = vector.load %arg6[%97, %c0_35, %c0_36] : memref<8x6x8xf32, #tpu.memory_space<vmem>>, vector<1x6x8xf32>
    %99 = vector.shape_cast %98 : vector<1x6x8xf32> to vector<6x8xf32>
    %100 = vector.extract_strided_slice %96 {offsets = [0, 0], sizes = [6, 7], strides = [1, 1]} : vector<6x8xf32> to vector<6x7xf32>
    %101 = tpu.concatenate %44, %100 in 1 : vector<6x1xf32>, vector<6x7xf32> -> vector<6x8xf32>
    %102 = arith.minimumf %101, %96 : vector<6x8xf32>
    %103 = arith.addf %99, %102 : vector<6x8xf32>
    %c8_i32 = arith.constant 8 : i32
    %104 = vector.extract_strided_slice %103 {offsets = [0, 7], sizes = [6, 1], strides = [1, 1]} : vector<6x8xf32> to vector<6x1xf32>
    %cst_37 = arith.constant 0.000000e+00 : f32
    %105 = vector.broadcast %cst_37 : f32 to vector<6x1xf32>
    %106 = arith.subf %105, %104 : vector<6x1xf32>
    %cst_38 = arith.constant dense<0xFF800000> : vector<1xf32>
    %107 = vector.multi_reduction <maximumf>, %106, %cst_38 [0] : vector<6x1xf32> to vector<1xf32>
    %108 = vector.shape_cast %107 : vector<1xf32> to vector<1x1xf32>
    %109 = vector.broadcast %108 : vector<1x1xf32> to vector<6x1xf32>
    %110 = arith.subf %106, %109 : vector<6x1xf32>
    %111 = math.exp %110 : vector<6x1xf32>
    %cst_39 = arith.constant dense<0.000000e+00> : vector<1xf32>
    %112 = vector.multi_reduction <add>, %111, %cst_39 [0] : vector<6x1xf32> to vector<1xf32>
    %113 = vector.shape_cast %112 : vector<1xf32> to vector<1x1xf32>
    %114 = tpu.reciprocal %113 {approx = true} : vector<1x1xf32> -> vector<1x1xf32>
    %115 = vector.broadcast %114 : vector<1x1xf32> to vector<6x1xf32>
    %116 = arith.mulf %111, %115 : vector<6x1xf32>
    %117 = vector.extract_strided_slice %116 {offsets = [0, 0], sizes = [3, 1], strides = [1, 1]} : vector<6x1xf32> to vector<3x1xf32>
    %cst_40 = arith.constant dense<0.000000e+00> : vector<1xf32>
    %118 = vector.multi_reduction <add>, %117, %cst_40 [0] : vector<3x1xf32> to vector<1xf32>
    %119 = vector.shape_cast %118 : vector<1xf32> to vector<1x1xf32>
    %120 = vector.extract_strided_slice %116 {offsets = [3, 0], sizes = [3, 1], strides = [1, 1]} : vector<6x1xf32> to vector<3x1xf32>
    %cst_41 = arith.constant dense<0.000000e+00> : vector<1xf32>
    %121 = vector.multi_reduction <add>, %120, %cst_41 [0] : vector<3x1xf32> to vector<1xf32>
    %122 = vector.shape_cast %121 : vector<1xf32> to vector<1x1xf32>
    %cst_42 = arith.constant 0.000000e+00 : f32
    %123 = vector.broadcast %cst_42 : f32 to vector<1x126xf32>
    %124 = tpu.concatenate %119, %122, %123 in 1 : vector<1x1xf32>, vector<1x1xf32>, vector<1x126xf32> -> vector<1x128xf32>
    %c0_43 = arith.constant 0 : index
    %c0_44 = arith.constant 0 : index
    %c0_45 = arith.constant 0 : index
    %125 = vector.load %arg5[%c0_43, %c0_44, %c0_45] : memref<1x1x128xf32, #tpu.memory_space<vmem>>, vector<1x1x128xf32>
    %126 = vector.shape_cast %125 : vector<1x1x128xf32> to vector<1x128xf32>
    %127 = vector.shape_cast %124 : vector<1x128xf32> to vector<1x1x128xf32>
    tpu.vector_store %arg5[%c0_43, %c0_44, %c0_45], %127 {strides = array<i32>} : memref<1x1x128xf32, #tpu.memory_space<vmem>>, vector<1x1x128xf32>,
    return
  }
  func.func @transform_0(%arg0: i32) -> (i32, i32, i32) {
    %c0_i32 = arith.constant 0 : i32
    %c0_i32_0 = arith.constant 0 : i32
    %c0_i32_1 = arith.constant 0 : i32
    return %arg0, %c0_i32, %c0_i32_0 : i32, i32, i32
  }
  func.func @transform_1(%arg0: i32) -> (i32, i32) {
    %c0_i32 = arith.constant 0 : i32
    %c0_i32_0 = arith.constant 0 : i32
    %c0_i32_1 = arith.constant 0 : i32
    return %c0_i32, %c0_i32_0 : i32, i32
  }
  func.func @transform_2(%arg0: i32) -> (i32, i32) {
    %c0_i32 = arith.constant 0 : i32
    %c0_i32_0 = arith.constant 0 : i32
    %c0_i32_1 = arith.constant 0 : i32
    return %c0_i32, %c0_i32_0 : i32, i32
  }
  func.func @transform_3(%arg0: i32) -> (i32, i32) {
    %c0_i32 = arith.constant 0 : i32
    %c0_i32_0 = arith.constant 0 : i32
    %c0_i32_1 = arith.constant 0 : i32
    return %c0_i32, %c0_i32_0 : i32, i32
  }
  func.func @transform_4(%arg0: i32) -> (i32, i32, i32) {
    %c0_i32 = arith.constant 0 : i32
    %c0_i32_0 = arith.constant 0 : i32
    %c0_i32_1 = arith.constant 0 : i32
    return %arg0, %c0_i32, %c0_i32_0 : i32, i32, i32
  }
}

</mosaic_0001>

<llo_original>
// kernel: tpu_custom_call.1
$region0: #{tpu_custom_call.1}
  #allocation0 [shape = 'u32[]', space=smem, size = 0x4, offset = 0x4, fixed_abs, tag = 'smem constant byte address 0x4 - core index']
  #allocation1 [shape = 'u32[72,128]{1,0:T(1,128)}', space=vmem, size = 0x9000, scoped, tag = 'internal scratch']
  #allocation2 [shape = 'f32[8,6,8]{2,1,0:T(8,128)}', space=vmem, size = 0x8000, scoped, tag = 'scratch operand']
  %s0 = inlined_call_operand.vmem [shape: f32[2,8,16], index: 0, kind: input, shape index: {}]
  %s1 = inlined_call_operand.vmem [shape: f32[6,1], index: 1, kind: input, shape index: {}]
  %s2 = inlined_call_operand.vmem [shape: f32[6,1], index: 2, kind: input, shape index: {}]
  %s3 = inlined_call_operand.hbm [shape: f32[6,128], index: 3, kind: input, shape index: {}]
  %s4 = inlined_call_operand.hbm [shape: f32[2,1,128], index: 4, kind: output, shape index: {}]
  %s5 = sld [smem:[#allocation0]]
  $region53: #{tpu_custom_call.1} parent=0
    _
  %s7 = ssub.s32 1, %s5
  %s8 = scalar_select 0, %s7, %s5
  $region1: #{tpu_custom_call.1} parent=0
    #allocation3 [shape = 'u8[4096]{0}', space=vmem, size = 0x1000, scoped, tag = 'input window, operand 3, single buffered']
    #allocation4 [shape = 's32[2]{0}', space=sflag, size = 0x8, scoped, tag = 'scoped memory for tpu_custom_call.1']
    #allocation5 [shape = 's32[2]{0}', space=sflag, size = 0x8, scoped, tag = 'scoped memory for tpu_custom_call.1']
    #allocation6 [shape = 'u8[1024]{0}', space=vmem, size = 0x400, scoped, tag = 'output window, operand 0']
    %9 = vsyncpa [#allocation4], 0
    %10 = vsyncpa [#allocation5], 0
    %s11 = scalar_lea.sflag [#allocation5], 1
    %12 = vsyncpa %s11, 0
    loop: start=0, step=1, limit=4
    $region2: #{tpu_custom_call.1} parent=1 // loop_pre_header
      _
    $region3: #{tpu_custom_call.1} parent=1 // loop_header
      %s14 = sphi 0, %s18
      %p15 = scmp.ge.s32.totalorder %s14, 4
      %s24 = sphi 0, %s26
      %s27 = sphi 0, %s24
      %s28 = sphi 0, %s27
      %s44 = sphi 0, %s28
      %s48 = sphi 0, %s48
      %s50 = sphi 0, %s48
      %s51 = sphi 0, %s50
      %s65 = sphi 0, %s51
      %s69 = sphi 0, %s69
      %s71 = sphi 0, %s69
      %s72 = sphi 0, %s71
      %s86 = sphi 0, %s72
      %s90 = sphi 0, %s90
      %s92 = sphi 0, %s90
      %s93 = sphi 0, %s92
      %s107 = sphi 0, %s93
      %s113 = sphi 0, %s115
      %s116 = sphi 0, %s113
      %s117 = sphi 0, %s116
      %s133 = sphi 0, %s117
    $region4: #{tpu_custom_call.1} parent=1 // loop_header_branch
      %17 = sbr.rel (%p15) target = $region8
    $region5: #{tpu_custom_call.1} parent=1 // loop_body
      %s19 = ssub.s32 %s14, 1
      %s20 = ssub.s32 %s14, 2
      %s21 = sadd.s32 %s14, 1
      %s22 = ssub.s32 %s14, %s21
      %p23 = scmp.eq.s32.totalorder %s22, 0
      %s25 = sadd.s32 %s24, 1
      %s26 = scalar_select %p23, %s24, %s25
      %p29 = pneg %p23
      %p30 = scmp.eq.s32.totalorder %s14, 1
      %p31 = por %p29, %p30
      %p32 = scmp.ne.s32.totalorder %s24, %s27
      %p33 = scmp.eq.s32.totalorder %s14, 0
      %p34 = por %p32, %p33
      %p35 = scmp.ne.s32.totalorder %s24, %s27
      %p36 = scmp.eq.s32.totalorder %s19, 1
      %p37 = por %p35, %p36
      %p38 = scmp.ne.s32.totalorder %s27, %s28
      %p39 = scmp.eq.s32.totalorder %s19, 0
      %p40 = por %p38, %p39
      %p41 = scmp.ne.s32.totalorder %s27, %s28
      %p42 = scmp.eq.s32.totalorder %s20, 1
      %p43 = por %p41, %p42
      %p45 = scmp.ne.s32.totalorder %s28, %s44
      %p46 = scmp.eq.s32.totalorder %s20, 0
      %p47 = por %p45, %p46
      %s49 = sadd.s32 %s48, 1
      %p52 = scmp.eq.s32.totalorder %s14, 1
      %p53 = scmp.ne.s32.totalorder %s48, %s50
      %p54 = scmp.eq.s32.totalorder %s14, 0
      %p55 = por %p53, %p54
      %p56 = scmp.ne.s32.totalorder %s48, %s50
      %p57 = scmp.eq.s32.totalorder %s19, 1
      %p58 = por %p56, %p57
      %p59 = scmp.ne.s32.totalorder %s50, %s51
      %p60 = scmp.eq.s32.totalorder %s19, 0
      %p61 = por %p59, %p60
      %p62 = scmp.ne.s32.totalorder %s50, %s51
      %p63 = scmp.eq.s32.totalorder %s20, 1
      %p64 = por %p62, %p63
      %p66 = scmp.ne.s32.totalorder %s51, %s65
      %p67 = scmp.eq.s32.totalorder %s20, 0
      %p68 = por %p66, %p67
      %s70 = sadd.s32 %s69, 1
      %p73 = scmp.eq.s32.totalorder %s14, 1
      %p74 = scmp.ne.s32.totalorder %s69, %s71
      %p75 = scmp.eq.s32.totalorder %s14, 0
      %p76 = por %p74, %p75
      %p77 = scmp.ne.s32.totalorder %s69, %s71
      %p78 = scmp.eq.s32.totalorder %s19, 1
      %p79 = por %p77, %p78
      %p80 = scmp.ne.s32.totalorder %s71, %s72
      %p81 = scmp.eq.s32.totalorder %s19, 0
      %p82 = por %p80, %p81
      %p83 = scmp.ne.s32.totalorder %s71, %s72
      %p84 = scmp.eq.s32.totalorder %s20, 1
      %p85 = por %p83, %p84
      %p87 = scmp.ne.s32.totalorder %s72, %s86
      %p88 = scmp.eq.s32.totalorder %s20, 0
      %p89 = por %p87, %p88
      %s91 = sadd.s32 %s90, 1
      %p94 = scmp.eq.s32.totalorder %s14, 1
      %p95 = scmp.ne.s32.totalorder %s90, %s92
      %p96 = scmp.eq.s32.totalorder %s14, 0
      %p97 = por %p95, %p96
      %p98 = scmp.ne.s32.totalorder %s90, %s92
      %p99 = scmp.eq.s32.totalorder %s19, 1
      %p100 = por %p98, %p99
      %p101 = scmp.ne.s32.totalorder %s92, %s93
      %p102 = scmp.eq.s32.totalorder %s19, 0
      %p103 = por %p101, %p102
      %p104 = scmp.ne.s32.totalorder %s92, %s93
      %p105 = scmp.eq.s32.totalorder %s20, 1
      %p106 = por %p104, %p105
      %p108 = scmp.ne.s32.totalorder %s93, %s107
      %p109 = scmp.eq.s32.totalorder %s20, 0
      %p110 = por %p108, %p109
      %s111 = ssub.s32 %s14, %s21
      %p112 = scmp.eq.s32.totalorder %s111, 0
      %s114 = sadd.s32 %s113, 1
      %s115 = scalar_select %p112, %s113, %s114
      %p118 = pneg %p112
      %p119 = scmp.eq.s32.totalorder %s14, 1
      %p120 = por %p118, %p119
      %p121 = scmp.ne.s32.totalorder %s113, %s116
      %p122 = scmp.eq.s32.totalorder %s14, 0
      %p123 = por %p121, %p122
      %p124 = scmp.ne.s32.totalorder %s113, %s116
      %p125 = scmp.eq.s32.totalorder %s19, 1
      %p126 = por %p124, %p125
      %p127 = scmp.ne.s32.totalorder %s116, %s117
      %p128 = scmp.eq.s32.totalorder %s19, 0
      %p129 = por %p127, %p128
      %p130 = scmp.ne.s32.totalorder %s116, %s117
      %p131 = scmp.eq.s32.totalorder %s20, 1
      %p132 = por %p130, %p131
      %p134 = scmp.ne.s32.totalorder %s117, %s133
      %p135 = scmp.eq.s32.totalorder %s20, 0
      %p136 = por %p134, %p135
      %p137 = scmp.le.s32.totalorder 1, %s14
      %p138 = scmp.lt.s32.totalorder %s14, 3
      %p139 = pnand %p137, %p138
      %p140 = pneg %p139
      // Predicated region
      $region9: #{tpu_custom_call.1} parent=5 // pred_check
        _
      $region10: #{tpu_custom_call.1} parent=5 // pred_check_branch
        %142 = sbr.rel (%p139) target = $region12
      $region11: #{tpu_custom_call.1} parent=5 // pred_region
        %s143 = ssub.s32 %s14, 1
        // Predicated region
        $region13: #{tpu_custom_call.1} parent=11 // pred_check
          %p144 = pneg %p61
        $region14: #{tpu_custom_call.1} parent=11 // pred_check_branch
          %146 = sbr.rel (%p144) target = $region16
        $region15: #{tpu_custom_call.1} parent=11 // pred_region
          _
        $region16: #{tpu_custom_call.1} parent=11 // pred_fallthru
          _
        // Predicated region
        $region17: #{tpu_custom_call.1} parent=11 // pred_check
          %p147 = pneg %p82
        $region18: #{tpu_custom_call.1} parent=11 // pred_check_branch
          %149 = sbr.rel (%p147) target = $region20
        $region19: #{tpu_custom_call.1} parent=11 // pred_region
          _
        $region20: #{tpu_custom_call.1} parent=11 // pred_fallthru
          _
        // Predicated region
        $region21: #{tpu_custom_call.1} parent=11 // pred_check
          %p150 = pneg %p103
        $region22: #{tpu_custom_call.1} parent=11 // pred_check_branch
          %152 = sbr.rel (%p150) target = $region24
        $region23: #{tpu_custom_call.1} parent=11 // pred_region
          %154 = vsyncadd [#allocation4], 0
          %s156 = sshll.u32 %s3, 4
          %s157 = int_to_ptr.hbm [resolvable:$true] %s156
          %s158 = sshll.u32 [#allocation3], 4
          %s159 = int_to_ptr.vmem [resolvable:$true] %s158
          %161 = dma.hbm_to_vmem [thread:$0]  %s157, 128, %s159, [#allocation4]
        $region24: #{tpu_custom_call.1} parent=11 // pred_fallthru
          _
      $region12: #{tpu_custom_call.1} parent=5 // pred_fallthru
        _
      %p162 = scmp.lt.s32.totalorder %s14, 2
      // Predicated region
      $region25: #{tpu_custom_call.1} parent=5 // pred_check
        %p163 = pneg %p162
      $region26: #{tpu_custom_call.1} parent=5 // pred_check_branch
        %165 = sbr.rel (%p163) target = $region28
      $region27: #{tpu_custom_call.1} parent=5 // pred_region
        // Predicated region
        $region29: #{tpu_custom_call.1} parent=27 // pred_check
          %p166 = pneg %p34
        $region30: #{tpu_custom_call.1} parent=27 // pred_check_branch
          %168 = sbr.rel (%p166) target = $region32
        $region31: #{tpu_custom_call.1} parent=27 // pred_region
          %p169 = scmp.lt.s32.totalorder %s14, 1
          %s170 = scalar_select %p169, %s14, 1
          %s171 = smul.addr %s170, 8
          %s172 = scalar_lea.vmem %s0, %s171
        $region32: #{tpu_custom_call.1} parent=27 // pred_fallthru
          _
      $region28: #{tpu_custom_call.1} parent=5 // pred_fallthru
        _
      %p173 = scmp.le.s32.totalorder 1, %s14
      %p174 = scmp.lt.s32.totalorder %s14, 3
      %p175 = pnand %p173, %p174
      %p176 = pneg %p175
      // Predicated region
      $region33: #{tpu_custom_call.1} parent=5 // pred_check
        _
      $region34: #{tpu_custom_call.1} parent=5 // pred_check_branch
        %178 = sbr.rel (%p175) target = $region36
      $region35: #{tpu_custom_call.1} parent=5 // pred_region
        %s179 = ssub.s32 %s14, 1
        // Predicated region
        $region37: #{tpu_custom_call.1} parent=35 // pred_check
          %p180 = pneg %p103
        $region38: #{tpu_custom_call.1} parent=35 // pred_check_branch
          %182 = sbr.rel (%p180) target = $region40
        $region39: #{tpu_custom_call.1} parent=35 // pred_region
          %184 = dma.done [#allocation4], 128
        $region40: #{tpu_custom_call.1} parent=35 // pred_fallthru
          _
        %p185 = scmp.lt.s32.totalorder %s19, 1
        %s186 = scalar_select %p185, %s19, 1
        %s187 = smul.addr %s186, 8
        %s188 = scalar_lea.vmem %s0, %s187
        %p189 = pneg %p40
        %p190 = pneg %p37
        %p191 = pneg %p61
        %p192 = pneg %p58
        %p193 = pneg %p82
        %p194 = pneg %p79
        %p195 = pneg %p103
        %p196 = pneg %p100
        %p197 = pneg %p129
        %p198 = pneg %p126
        %s199 = sand.u32 %s116, 1
        %s200 = scalar_lea.sflag [#allocation5], %s199
        %s201 = sand.u32 %s116, 1
        %s202 = scalar_lea.vmem [#allocation6], %s201
        %p203 = scmp.lt.s32.totalorder %s19, 1
        %s204 = scalar_select %p203, %s19, 1
        %s205 = smul.addr %s204, 8
        %s206 = scalar_lea.vmem %s0, %s205
        %v207 = vld [vmem:[%s206] sm:$0xff]
        %v208 = vld [vmem:[%s1] sm:$0x3f]
        %v209 = vld [vmem:[%s2] sm:$0x3f]
        %v210 = vld [vmem:[#allocation3] sm:$0x3f]
        %v212 = vrot.slane %v207, 1
        %v213 = vrot.slane %v207, 2
        %v214 = vrot.slane %v207, 3
        %v215 = vrot.slane %v207, 4
        %v216 = vrot.slane %v207, 5
        %v217 = vrot.slane %v207, 6
        %v218 = vrot.slane %v207, 7
        %v219 = vperm.slane %v207, 0
        %v220 = vperm.slane %v212, 0
        %v221 = vperm.slane %v213, 0
        %v222 = vperm.slane %v214, 0
        %v223 = vperm.slane %v215, 0
        %v224 = vperm.slane %v216, 0
        %v225 = vperm.slane %v217, 0
        %v226 = vperm.slane %v218, 0
        %236 = vset.pattern.permute.xlu0 0
        %237 = vperm.xlu0 %236, %v208
        %v238 = vpop.permute.xlu0 %237
        %v240 = vmul.f32 %v219, %v238
        %v241 = vmul.f32 %v220, %v238
        %v242 = vmul.f32 %v221, %v238
        %v243 = vmul.f32 %v222, %v238
        %v244 = vmul.f32 %v223, %v238
        %v245 = vmul.f32 %v224, %v238
        %v246 = vmul.f32 %v225, %v238
        %v247 = vmul.f32 %v226, %v238
        %249 = vset.pattern.permute.xlu0 0
        %250 = vperm.xlu0 %249, %v209
        %v251 = vpop.permute.xlu0 %250
        %v253 = vadd.f32 %v240, %v251
        %v254 = vadd.f32 %v241, %v251
        %v255 = vadd.f32 %v242, %v251
        %v256 = vadd.f32 %v243, %v251
        %v257 = vadd.f32 %v244, %v251
        %v258 = vadd.f32 %v245, %v251
        %v259 = vadd.f32 %v246, %v251
        %v260 = vadd.f32 %v247, %v251
        %269 = vrot.lane.b32.xlu0 %v253, 16
        %v270 = vpop.permute.xlu0 %269
        %271 = vrot.lane.b32.xlu0 %v254, 16
        %v272 = vpop.permute.xlu0 %271
        %273 = vrot.lane.b32.xlu0 %v255, 16
        %v274 = vpop.permute.xlu0 %273
        %275 = vrot.lane.b32.xlu0 %v256, 16
        %v276 = vpop.permute.xlu0 %275
        %277 = vrot.lane.b32.xlu0 %v257, 16
        %v278 = vpop.permute.xlu0 %277
        %279 = vrot.lane.b32.xlu0 %v258, 16
        %v280 = vpop.permute.xlu0 %279
        %281 = vrot.lane.b32.xlu0 %v259, 16
        %v282 = vpop.permute.xlu0 %281
        %283 = vrot.lane.b32.xlu0 %v260, 16
        %v284 = vpop.permute.xlu0 %283
        %293 = vrot.lane.b32.xlu0 %v253, 32
        %v294 = vpop.permute.xlu0 %293
        %295 = vrot.lane.b32.xlu0 %v254, 32
        %v296 = vpop.permute.xlu0 %295
        %297 = vrot.lane.b32.xlu0 %v255, 32
        %v298 = vpop.permute.xlu0 %297
        %299 = vrot.lane.b32.xlu0 %v256, 32
        %v300 = vpop.permute.xlu0 %299
        %301 = vrot.lane.b32.xlu0 %v257, 32
        %v302 = vpop.permute.xlu0 %301
        %303 = vrot.lane.b32.xlu0 %v258, 32
        %v304 = vpop.permute.xlu0 %303
        %305 = vrot.lane.b32.xlu0 %v259, 32
        %v306 = vpop.permute.xlu0 %305
        %307 = vrot.lane.b32.xlu0 %v260, 32
        %v308 = vpop.permute.xlu0 %307
        %317 = vrot.lane.b32.xlu0 %v253, 48
        %v318 = vpop.permute.xlu0 %317
        %319 = vrot.lane.b32.xlu0 %v254, 48
        %v320 = vpop.permute.xlu0 %319
        %321 = vrot.lane.b32.xlu0 %v255, 48
        %v322 = vpop.permute.xlu0 %321
        %323 = vrot.lane.b32.xlu0 %v256, 48
        %v324 = vpop.permute.xlu0 %323
        %325 = vrot.lane.b32.xlu0 %v257, 48
        %v326 = vpop.permute.xlu0 %325
        %327 = vrot.lane.b32.xlu0 %v258, 48
        %v328 = vpop.permute.xlu0 %327
        %329 = vrot.lane.b32.xlu0 %v259, 48
        %v330 = vpop.permute.xlu0 %329
        %331 = vrot.lane.b32.xlu0 %v260, 48
        %v332 = vpop.permute.xlu0 %331
        %341 = vrot.lane.b32.xlu0 %v253, 64
        %v342 = vpop.permute.xlu0 %341
        %343 = vrot.lane.b32.xlu0 %v254, 64
        %v344 = vpop.permute.xlu0 %343
        %345 = vrot.lane.b32.xlu0 %v255, 64
        %v346 = vpop.permute.xlu0 %345
        %347 = vrot.lane.b32.xlu0 %v256, 64
        %v348 = vpop.permute.xlu0 %347
        %349 = vrot.lane.b32.xlu0 %v257, 64
        %v350 = vpop.permute.xlu0 %349
        %351 = vrot.lane.b32.xlu0 %v258, 64
        %v352 = vpop.permute.xlu0 %351
        %353 = vrot.lane.b32.xlu0 %v259, 64
        %v354 = vpop.permute.xlu0 %353
        %355 = vrot.lane.b32.xlu0 %v260, 64
        %v356 = vpop.permute.xlu0 %355
        %365 = vrot.lane.b32.xlu0 %v253, 80
        %v366 = vpop.permute.xlu0 %365
        %367 = vrot.lane.b32.xlu0 %v254, 80
        %v368 = vpop.permute.xlu0 %367
        %369 = vrot.lane.b32.xlu0 %v255, 80
        %v370 = vpop.permute.xlu0 %369
        %371 = vrot.lane.b32.xlu0 %v256, 80
        %v372 = vpop.permute.xlu0 %371
        %373 = vrot.lane.b32.xlu0 %v257, 80
        %v374 = vpop.permute.xlu0 %373
        %375 = vrot.lane.b32.xlu0 %v258, 80
        %v376 = vpop.permute.xlu0 %375
        %377 = vrot.lane.b32.xlu0 %v259, 80
        %v378 = vpop.permute.xlu0 %377
        %379 = vrot.lane.b32.xlu0 %v260, 80
        %v380 = vpop.permute.xlu0 %379
        %389 = vrot.lane.b32.xlu0 %v253, 96
        %v390 = vpop.permute.xlu0 %389
        %391 = vrot.lane.b32.xlu0 %v254, 96
        %v392 = vpop.permute.xlu0 %391
        %393 = vrot.lane.b32.xlu0 %v255, 96
        %v394 = vpop.permute.xlu0 %393
        %395 = vrot.lane.b32.xlu0 %v256, 96
        %v396 = vpop.permute.xlu0 %395
        %397 = vrot.lane.b32.xlu0 %v257, 96
        %v398 = vpop.permute.xlu0 %397
        %399 = vrot.lane.b32.xlu0 %v258, 96
        %v400 = vpop.permute.xlu0 %399
        %401 = vrot.lane.b32.xlu0 %v259, 96
        %v402 = vpop.permute.xlu0 %401
        %403 = vrot.lane.b32.xlu0 %v260, 96
        %v404 = vpop.permute.xlu0 %403
        %413 = vrot.lane.b32.xlu0 %v253, 112
        %v414 = vpop.permute.xlu0 %413
        %415 = vrot.lane.b32.xlu0 %v254, 112
        %v416 = vpop.permute.xlu0 %415
        %417 = vrot.lane.b32.xlu0 %v255, 112
        %v418 = vpop.permute.xlu0 %417
        %419 = vrot.lane.b32.xlu0 %v256, 112
        %v420 = vpop.permute.xlu0 %419
        %421 = vrot.lane.b32.xlu0 %v257, 112
        %v422 = vpop.permute.xlu0 %421
        %423 = vrot.lane.b32.xlu0 %v258, 112
        %v424 = vpop.permute.xlu0 %423
        %425 = vrot.lane.b32.xlu0 %v259, 112
        %v426 = vpop.permute.xlu0 %425
        %427 = vrot.lane.b32.xlu0 %v260, 112
        %v428 = vpop.permute.xlu0 %427
        %vm437 = vcmask 130048
        %v438 = vsel %vm437, %v253, %v270
        %v439 = vsel %vm437, %v254, %v272
        %v440 = vsel %vm437, %v255, %v274
        %v441 = vsel %vm437, %v256, %v276
        %v442 = vsel %vm437, %v257, %v278
        %v443 = vsel %vm437, %v258, %v280
        %v444 = vsel %vm437, %v259, %v282
        %v445 = vsel %vm437, %v260, %v284
        %vm446 = vcmask 261120
        %v447 = vsel %vm446, %v438, %v294
        %v448 = vsel %vm446, %v439, %v296
        %v449 = vsel %vm446, %v440, %v298
        %v450 = vsel %vm446, %v441, %v300
        %v451 = vsel %vm446, %v442, %v302
        %v452 = vsel %vm446, %v443, %v304
        %v453 = vsel %vm446, %v444, %v306
        %v454 = vsel %vm446, %v445, %v308
        %vm455 = vcmask 392192
        %v456 = vsel %vm455, %v447, %v318
        %v457 = vsel %vm455, %v448, %v320
        %v458 = vsel %vm455, %v449, %v322
        %v459 = vsel %vm455, %v450, %v324
        %v460 = vsel %vm455, %v451, %v326
        %v461 = vsel %vm455, %v452, %v328
        %v462 = vsel %vm455, %v453, %v330
        %v463 = vsel %vm455, %v454, %v332
        %vm464 = vcmask 523264
        %v465 = vsel %vm464, %v456, %v342
        %v466 = vsel %vm464, %v457, %v344
        %v467 = vsel %vm464, %v458, %v346
        %v468 = vsel %vm464, %v459, %v348
        %v469 = vsel %vm464, %v460, %v350
        %v470 = vsel %vm464, %v461, %v352
        %v471 = vsel %vm464, %v462, %v354
        %v472 = vsel %vm464, %v463, %v356
        %vm473 = vcmask 654336
        %v474 = vsel %vm473, %v465, %v366
        %v475 = vsel %vm473, %v466, %v368
        %v476 = vsel %vm473, %v467, %v370
        %v477 = vsel %vm473, %v468, %v372
        %v478 = vsel %vm473, %v469, %v374
        %v479 = vsel %vm473, %v470, %v376
        %v480 = vsel %vm473, %v471, %v378
        %v481 = vsel %vm473, %v472, %v380
        %vm482 = vcmask 785408
        %v483 = vsel %vm482, %v474, %v390
        %v484 = vsel %vm482, %v475, %v392
        %v485 = vsel %vm482, %v476, %v394
        %v486 = vsel %vm482, %v477, %v396
        %v487 = vsel %vm482, %v478, %v398
        %v488 = vsel %vm482, %v479, %v400
        %v489 = vsel %vm482, %v480, %v402
        %v490 = vsel %vm482, %v481, %v404
        %vm491 = vcmask 916480
        %v492 = vsel %vm491, %v483, %v414
        %v493 = vsel %vm491, %v484, %v416
        %v494 = vsel %vm491, %v485, %v418
        %v495 = vsel %vm491, %v486, %v420
        %v496 = vsel %vm491, %v487, %v422
        %v497 = vsel %vm491, %v488, %v424
        %v498 = vsel %vm491, %v489, %v426
        %v499 = vsel %vm491, %v490, %v428
        %v500 = vsub.f32 %v210, %v492
        %v501 = vsub.f32 %v210, %v493
        %v502 = vsub.f32 %v210, %v494
        %v503 = vsub.f32 %v210, %v495
        %v504 = vsub.f32 %v210, %v496
        %v505 = vsub.f32 %v210, %v497
        %v506 = vsub.f32 %v210, %v498
        %v507 = vsub.f32 %v210, %v499
        %v508 = vand.u32 2147483647, %v500
        %v509 = vand.u32 2147483647, %v501
        %v510 = vand.u32 2147483647, %v502
        %v511 = vand.u32 2147483647, %v503
        %v512 = vand.u32 2147483647, %v504
        %v513 = vand.u32 2147483647, %v505
        %v514 = vand.u32 2147483647, %v506
        %v515 = vand.u32 2147483647, %v507
        %vm516 = vcmask 128000
        %v517 = vsel %vm516, %v508, 0.0
        %518 = vadd.xlane.f32.xlu0 %v517
        %v519 = vpop.xlane.xlu0 %518
        %v520 = vsel %vm516, %v509, 0.0
        %521 = vadd.xlane.f32.xlu0 %v520
        %v522 = vpop.xlane.xlu0 %521
        %v523 = vsel %vm516, %v510, 0.0
        %524 = vadd.xlane.f32.xlu0 %v523
        %v525 = vpop.xlane.xlu0 %524
        %v526 = vsel %vm516, %v511, 0.0
        %527 = vadd.xlane.f32.xlu0 %v526
        %v528 = vpop.xlane.xlu0 %527
        %v529 = vsel %vm516, %v512, 0.0
        %530 = vadd.xlane.f32.xlu0 %v529
        %v531 = vpop.xlane.xlu0 %530
        %v532 = vsel %vm516, %v513, 0.0
        %533 = vadd.xlane.f32.xlu0 %v532
        %v534 = vpop.xlane.xlu0 %533
        %v535 = vsel %vm516, %v514, 0.0
        %536 = vadd.xlane.f32.xlu0 %v535
        %v537 = vpop.xlane.xlu0 %536
        %v538 = vsel %vm516, %v515, 0.0
        %539 = vadd.xlane.f32.xlu0 %v538
        %v540 = vpop.xlane.xlu0 %539
        %549 = vrot.lane.b32.xlu0 %v508, 112
        %v550 = vpop.permute.xlu0 %549
        %551 = vrot.lane.b32.xlu0 %v509, 112
        %v552 = vpop.permute.xlu0 %551
        %553 = vrot.lane.b32.xlu0 %v510, 112
        %v554 = vpop.permute.xlu0 %553
        %555 = vrot.lane.b32.xlu0 %v511, 112
        %v556 = vpop.permute.xlu0 %555
        %557 = vrot.lane.b32.xlu0 %v512, 112
        %v558 = vpop.permute.xlu0 %557
        %559 = vrot.lane.b32.xlu0 %v513, 112
        %v560 = vpop.permute.xlu0 %559
        %561 = vrot.lane.b32.xlu0 %v514, 112
        %v562 = vpop.permute.xlu0 %561
        %563 = vrot.lane.b32.xlu0 %v515, 112
        %v564 = vpop.permute.xlu0 %563
        %v573 = vsel %vm516, %v550, 0.0
        %574 = vadd.xlane.f32.xlu0 %v573
        %v575 = vpop.xlane.xlu0 %574
        %v576 = vsel %vm516, %v552, 0.0
        %577 = vadd.xlane.f32.xlu0 %v576
        %v578 = vpop.xlane.xlu0 %577
        %v579 = vsel %vm516, %v554, 0.0
        %580 = vadd.xlane.f32.xlu0 %v579
        %v581 = vpop.xlane.xlu0 %580
        %v582 = vsel %vm516, %v556, 0.0
        %583 = vadd.xlane.f32.xlu0 %v582
        %v584 = vpop.xlane.xlu0 %583
        %v585 = vsel %vm516, %v558, 0.0
        %586 = vadd.xlane.f32.xlu0 %v585
        %v587 = vpop.xlane.xlu0 %586
        %v588 = vsel %vm516, %v560, 0.0
        %589 = vadd.xlane.f32.xlu0 %v588
        %v590 = vpop.xlane.xlu0 %589
        %v591 = vsel %vm516, %v562, 0.0
        %592 = vadd.xlane.f32.xlu0 %v591
        %v593 = vpop.xlane.xlu0 %592
        %v594 = vsel %vm516, %v564, 0.0
        %595 = vadd.xlane.f32.xlu0 %v594
        %v596 = vpop.xlane.xlu0 %595
        %597 = vrot.lane.b32.xlu0 %v508, 96
        %v598 = vpop.permute.xlu0 %597
        %599 = vrot.lane.b32.xlu0 %v509, 96
        %v600 = vpop.permute.xlu0 %599
        %601 = vrot.lane.b32.xlu0 %v510, 96
        %v602 = vpop.permute.xlu0 %601
        %603 = vrot.lane.b32.xlu0 %v511, 96
        %v604 = vpop.permute.xlu0 %603
        %605 = vrot.lane.b32.xlu0 %v512, 96
        %v606 = vpop.permute.xlu0 %605
        %607 = vrot.lane.b32.xlu0 %v513, 96
        %v608 = vpop.permute.xlu0 %607
        %609 = vrot.lane.b32.xlu0 %v514, 96
        %v610 = vpop.permute.xlu0 %609
        %611 = vrot.lane.b32.xlu0 %v515, 96
        %v612 = vpop.permute.xlu0 %611
        %v621 = vsel %vm516, %v598, 0.0
        %622 = vadd.xlane.f32.xlu0 %v621
        %v623 = vpop.xlane.xlu0 %622
        %v624 = vsel %vm516, %v600, 0.0
        %625 = vadd.xlane.f32.xlu0 %v624
        %v626 = vpop.xlane.xlu0 %625
        %v627 = vsel %vm516, %v602, 0.0
        %628 = vadd.xlane.f32.xlu0 %v627
        %v629 = vpop.xlane.xlu0 %628
        %v630 = vsel %vm516, %v604, 0.0
        %631 = vadd.xlane.f32.xlu0 %v630
        %v632 = vpop.xlane.xlu0 %631
        %v633 = vsel %vm516, %v606, 0.0
        %634 = vadd.xlane.f32.xlu0 %v633
        %v635 = vpop.xlane.xlu0 %634
        %v636 = vsel %vm516, %v608, 0.0
        %637 = vadd.xlane.f32.xlu0 %v636
        %v638 = vpop.xlane.xlu0 %637
        %v639 = vsel %vm516, %v610, 0.0
        %640 = vadd.xlane.f32.xlu0 %v639
        %v641 = vpop.xlane.xlu0 %640
        %v642 = vsel %vm516, %v612, 0.0
        %643 = vadd.xlane.f32.xlu0 %v642
        %v644 = vpop.xlane.xlu0 %643
        %645 = vrot.lane.b32.xlu0 %v508, 80
        %v646 = vpop.permute.xlu0 %645
        %647 = vrot.lane.b32.xlu0 %v509, 80
        %v648 = vpop.permute.xlu0 %647
        %649 = vrot.lane.b32.xlu0 %v510, 80
        %v650 = vpop.permute.xlu0 %649
        %651 = vrot.lane.b32.xlu0 %v511, 80
        %v652 = vpop.permute.xlu0 %651
        %653 = vrot.lane.b32.xlu0 %v512, 80
        %v654 = vpop.permute.xlu0 %653
        %655 = vrot.lane.b32.xlu0 %v513, 80
        %v656 = vpop.permute.xlu0 %655
        %657 = vrot.lane.b32.xlu0 %v514, 80
        %v658 = vpop.permute.xlu0 %657
        %659 = vrot.lane.b32.xlu0 %v515, 80
        %v660 = vpop.permute.xlu0 %659
        %v669 = vsel %vm516, %v646, 0.0
        %670 = vadd.xlane.f32.xlu0 %v669
        %v671 = vpop.xlane.xlu0 %670
        %v672 = vsel %vm516, %v648, 0.0
        %673 = vadd.xlane.f32.xlu0 %v672
        %v674 = vpop.xlane.xlu0 %673
        %v675 = vsel %vm516, %v650, 0.0
        %676 = vadd.xlane.f32.xlu0 %v675
        %v677 = vpop.xlane.xlu0 %676
        %v678 = vsel %vm516, %v652, 0.0
        %679 = vadd.xlane.f32.xlu0 %v678
        %v680 = vpop.xlane.xlu0 %679
        %v681 = vsel %vm516, %v654, 0.0
        %682 = vadd.xlane.f32.xlu0 %v681
        %v683 = vpop.xlane.xlu0 %682
        %v684 = vsel %vm516, %v656, 0.0
        %685 = vadd.xlane.f32.xlu0 %v684
        %v686 = vpop.xlane.xlu0 %685
        %v687 = vsel %vm516, %v658, 0.0
        %688 = vadd.xlane.f32.xlu0 %v687
        %v689 = vpop.xlane.xlu0 %688
        %v690 = vsel %vm516, %v660, 0.0
        %691 = vadd.xlane.f32.xlu0 %v690
        %v692 = vpop.xlane.xlu0 %691
        %693 = vrot.lane.b32.xlu0 %v508, 64
        %v694 = vpop.permute.xlu0 %693
        %695 = vrot.lane.b32.xlu0 %v509, 64
        %v696 = vpop.permute.xlu0 %695
        %697 = vrot.lane.b32.xlu0 %v510, 64
        %v698 = vpop.permute.xlu0 %697
        %699 = vrot.lane.b32.xlu0 %v511, 64
        %v700 = vpop.permute.xlu0 %699
        %701 = vrot.lane.b32.xlu0 %v512, 64
        %v702 = vpop.permute.xlu0 %701
        %703 = vrot.lane.b32.xlu0 %v513, 64
        %v704 = vpop.permute.xlu0 %703
        %705 = vrot.lane.b32.xlu0 %v514, 64
        %v706 = vpop.permute.xlu0 %705
        %707 = vrot.lane.b32.xlu0 %v515, 64
        %v708 = vpop.permute.xlu0 %707
        %v717 = vsel %vm516, %v694, 0.0
        %718 = vadd.xlane.f32.xlu0 %v717
        %v719 = vpop.xlane.xlu0 %718
        %v720 = vsel %vm516, %v696, 0.0
        %721 = vadd.xlane.f32.xlu0 %v720
        %v722 = vpop.xlane.xlu0 %721
        %v723 = vsel %vm516, %v698, 0.0
        %724 = vadd.xlane.f32.xlu0 %v723
        %v725 = vpop.xlane.xlu0 %724
        %v726 = vsel %vm516, %v700, 0.0
        %727 = vadd.xlane.f32.xlu0 %v726
        %v728 = vpop.xlane.xlu0 %727
        %v729 = vsel %vm516, %v702, 0.0
        %730 = vadd.xlane.f32.xlu0 %v729
        %v731 = vpop.xlane.xlu0 %730
        %v732 = vsel %vm516, %v704, 0.0
        %733 = vadd.xlane.f32.xlu0 %v732
        %v734 = vpop.xlane.xlu0 %733
        %v735 = vsel %vm516, %v706, 0.0
        %736 = vadd.xlane.f32.xlu0 %v735
        %v737 = vpop.xlane.xlu0 %736
        %v738 = vsel %vm516, %v708, 0.0
        %739 = vadd.xlane.f32.xlu0 %v738
        %v740 = vpop.xlane.xlu0 %739
        %741 = vrot.lane.b32.xlu0 %v508, 48
        %v742 = vpop.permute.xlu0 %741
        %743 = vrot.lane.b32.xlu0 %v509, 48
        %v744 = vpop.permute.xlu0 %743
        %745 = vrot.lane.b32.xlu0 %v510, 48
        %v746 = vpop.permute.xlu0 %745
        %747 = vrot.lane.b32.xlu0 %v511, 48
        %v748 = vpop.permute.xlu0 %747
        %749 = vrot.lane.b32.xlu0 %v512, 48
        %v750 = vpop.permute.xlu0 %749
        %751 = vrot.lane.b32.xlu0 %v513, 48
        %v752 = vpop.permute.xlu0 %751
        %753 = vrot.lane.b32.xlu0 %v514, 48
        %v754 = vpop.permute.xlu0 %753
        %755 = vrot.lane.b32.xlu0 %v515, 48
        %v756 = vpop.permute.xlu0 %755
        %v765 = vsel %vm516, %v742, 0.0
        %766 = vadd.xlane.f32.xlu0 %v765
        %v767 = vpop.xlane.xlu0 %766
        %v768 = vsel %vm516, %v744, 0.0
        %769 = vadd.xlane.f32.xlu0 %v768
        %v770 = vpop.xlane.xlu0 %769
        %v771 = vsel %vm516, %v746, 0.0
        %772 = vadd.xlane.f32.xlu0 %v771
        %v773 = vpop.xlane.xlu0 %772
        %v774 = vsel %vm516, %v748, 0.0
        %775 = vadd.xlane.f32.xlu0 %v774
        %v776 = vpop.xlane.xlu0 %775
        %v777 = vsel %vm516, %v750, 0.0
        %778 = vadd.xlane.f32.xlu0 %v777
        %v779 = vpop.xlane.xlu0 %778
        %v780 = vsel %vm516, %v752, 0.0
        %781 = vadd.xlane.f32.xlu0 %v780
        %v782 = vpop.xlane.xlu0 %781
        %v783 = vsel %vm516, %v754, 0.0
        %784 = vadd.xlane.f32.xlu0 %v783
        %v785 = vpop.xlane.xlu0 %784
        %v786 = vsel %vm516, %v756, 0.0
        %787 = vadd.xlane.f32.xlu0 %v786
        %v788 = vpop.xlane.xlu0 %787
        %789 = vrot.lane.b32.xlu0 %v508, 32
        %v790 = vpop.permute.xlu0 %789
        %791 = vrot.lane.b32.xlu0 %v509, 32
        %v792 = vpop.permute.xlu0 %791
        %793 = vrot.lane.b32.xlu0 %v510, 32
        %v794 = vpop.permute.xlu0 %793
        %795 = vrot.lane.b32.xlu0 %v511, 32
        %v796 = vpop.permute.xlu0 %795
        %797 = vrot.lane.b32.xlu0 %v512, 32
        %v798 = vpop.permute.xlu0 %797
        %799 = vrot.lane.b32.xlu0 %v513, 32
        %v800 = vpop.permute.xlu0 %799
        %801 = vrot.lane.b32.xlu0 %v514, 32
        %v802 = vpop.permute.xlu0 %801
        %803 = vrot.lane.b32.xlu0 %v515, 32
        %v804 = vpop.permute.xlu0 %803
        %v813 = vsel %vm516, %v790, 0.0
        %814 = vadd.xlane.f32.xlu0 %v813
        %v815 = vpop.xlane.xlu0 %814
        %v816 = vsel %vm516, %v792, 0.0
        %817 = vadd.xlane.f32.xlu0 %v816
        %v818 = vpop.xlane.xlu0 %817
        %v819 = vsel %vm516, %v794, 0.0
        %820 = vadd.xlane.f32.xlu0 %v819
        %v821 = vpop.xlane.xlu0 %820
        %v822 = vsel %vm516, %v796, 0.0
        %823 = vadd.xlane.f32.xlu0 %v822
        %v824 = vpop.xlane.xlu0 %823
        %v825 = vsel %vm516, %v798, 0.0
        %826 = vadd.xlane.f32.xlu0 %v825
        %v827 = vpop.xlane.xlu0 %826
        %v828 = vsel %vm516, %v800, 0.0
        %829 = vadd.xlane.f32.xlu0 %v828
        %v830 = vpop.xlane.xlu0 %829
        %v831 = vsel %vm516, %v802, 0.0
        %832 = vadd.xlane.f32.xlu0 %v831
        %v833 = vpop.xlane.xlu0 %832
        %v834 = vsel %vm516, %v804, 0.0
        %835 = vadd.xlane.f32.xlu0 %v834
        %v836 = vpop.xlane.xlu0 %835
        %837 = vrot.lane.b32.xlu0 %v508, 16
        %v838 = vpop.permute.xlu0 %837
        %839 = vrot.lane.b32.xlu0 %v509, 16
        %v840 = vpop.permute.xlu0 %839
        %841 = vrot.lane.b32.xlu0 %v510, 16
        %v842 = vpop.permute.xlu0 %841
        %843 = vrot.lane.b32.xlu0 %v511, 16
        %v844 = vpop.permute.xlu0 %843
        %845 = vrot.lane.b32.xlu0 %v512, 16
        %v846 = vpop.permute.xlu0 %845
        %847 = vrot.lane.b32.xlu0 %v513, 16
        %v848 = vpop.permute.xlu0 %847
        %849 = vrot.lane.b32.xlu0 %v514, 16
        %v850 = vpop.permute.xlu0 %849
        %851 = vrot.lane.b32.xlu0 %v515, 16
        %v852 = vpop.permute.xlu0 %851
        %v861 = vsel %vm516, %v838, 0.0
        %862 = vadd.xlane.f32.xlu0 %v861
        %v863 = vpop.xlane.xlu0 %862
        %v864 = vsel %vm516, %v840, 0.0
        %865 = vadd.xlane.f32.xlu0 %v864
        %v866 = vpop.xlane.xlu0 %865
        %v867 = vsel %vm516, %v842, 0.0
        %868 = vadd.xlane.f32.xlu0 %v867
        %v869 = vpop.xlane.xlu0 %868
        %v870 = vsel %vm516, %v844, 0.0
        %871 = vadd.xlane.f32.xlu0 %v870
        %v872 = vpop.xlane.xlu0 %871
        %v873 = vsel %vm516, %v846, 0.0
        %874 = vadd.xlane.f32.xlu0 %v873
        %v875 = vpop.xlane.xlu0 %874
        %v876 = vsel %vm516, %v848, 0.0
        %877 = vadd.xlane.f32.xlu0 %v876
        %v878 = vpop.xlane.xlu0 %877
        %v879 = vsel %vm516, %v850, 0.0
        %880 = vadd.xlane.f32.xlu0 %v879
        %v881 = vpop.xlane.xlu0 %880
        %v882 = vsel %vm516, %v852, 0.0
        %883 = vadd.xlane.f32.xlu0 %v882
        %v884 = vpop.xlane.xlu0 %883
        %vm885 = vcmask 7168
        %v886 = vsel %vm885, %v519, %v575
        %v887 = vsel %vm885, %v522, %v578
        %v888 = vsel %vm885, %v525, %v581
        %v889 = vsel %vm885, %v528, %v584
        %v890 = vsel %vm885, %v531, %v587
        %v891 = vsel %vm885, %v534, %v590
        %v892 = vsel %vm885, %v537, %v593
        %v893 = vsel %vm885, %v540, %v596
        %vm894 = vcmask 15360
        %v895 = vsel %vm894, %v886, %v623
        %v896 = vsel %vm894, %v887, %v626
        %v897 = vsel %vm894, %v888, %v629
        %v898 = vsel %vm894, %v889, %v632
        %v899 = vsel %vm894, %v890, %v635
        %v900 = vsel %vm894, %v891, %v638
        %v901 = vsel %vm894, %v892, %v641
        %v902 = vsel %vm894, %v893, %v644
        %vm903 = vcmask 23552
        %v904 = vsel %vm903, %v895, %v671
        %v905 = vsel %vm903, %v896, %v674
        %v906 = vsel %vm903, %v897, %v677
        %v907 = vsel %vm903, %v898, %v680
        %v908 = vsel %vm903, %v899, %v683
        %v909 = vsel %vm903, %v900, %v686
        %v910 = vsel %vm903, %v901, %v689
        %v911 = vsel %vm903, %v902, %v692
        %vm912 = vcmask 31744
        %v913 = vsel %vm912, %v904, %v719
        %v914 = vsel %vm912, %v905, %v722
        %v915 = vsel %vm912, %v906, %v725
        %v916 = vsel %vm912, %v907, %v728
        %v917 = vsel %vm912, %v908, %v731
        %v918 = vsel %vm912, %v909, %v734
        %v919 = vsel %vm912, %v910, %v737
        %v920 = vsel %vm912, %v911, %v740
        %vm921 = vcmask 39936
        %v922 = vsel %vm921, %v913, %v767
        %v923 = vsel %vm921, %v914, %v770
        %v924 = vsel %vm921, %v915, %v773
        %v925 = vsel %vm921, %v916, %v776
        %v926 = vsel %vm921, %v917, %v779
        %v927 = vsel %vm921, %v918, %v782
        %v928 = vsel %vm921, %v919, %v785
        %v929 = vsel %vm921, %v920, %v788
        %vm930 = vcmask 48128
        %v931 = vsel %vm930, %v922, %v815
        %v932 = vsel %vm930, %v923, %v818
        %v933 = vsel %vm930, %v924, %v821
        %v934 = vsel %vm930, %v925, %v824
        %v935 = vsel %vm930, %v926, %v827
        %v936 = vsel %vm930, %v927, %v830
        %v937 = vsel %vm930, %v928, %v833
        %v938 = vsel %vm930, %v929, %v836
        %vm939 = vcmask 56320
        %v940 = vsel %vm939, %v931, %v863
        %v941 = vsel %vm939, %v932, %v866
        %v942 = vsel %vm939, %v933, %v869
        %v943 = vsel %vm939, %v934, %v872
        %v944 = vsel %vm939, %v935, %v875
        %v945 = vsel %vm939, %v936, %v878
        %v946 = vsel %vm939, %v937, %v881
        %v947 = vsel %vm939, %v938, %v884
        %vm948 = vcmask 62464
        %949 = vst.msk [vmem:[#allocation2] sm:$0x3f] %vm948, %v940
        %950 = vst.msk [vmem:[#allocation2 + $0x8] sm:$0x3f] %vm948, %v941
        %951 = vst.msk [vmem:[#allocation2 + $0x10] sm:$0x3f] %vm948, %v942
        %952 = vst.msk [vmem:[#allocation2 + $0x18] sm:$0x3f] %vm948, %v943
        %953 = vst.msk [vmem:[#allocation2 + $0x20] sm:$0x3f] %vm948, %v944
        %954 = vst.msk [vmem:[#allocation2 + $0x28] sm:$0x3f] %vm948, %v945
        %955 = vst.msk [vmem:[#allocation2 + $0x30] sm:$0x3f] %vm948, %v946
        %956 = vst.msk [vmem:[#allocation2 + $0x38] sm:$0x3f] %vm948, %v947
        %v957 = vsel %vm885, 0.0, inf
        %v958 = vld [vmem:[#allocation2] sm:$0x3f]
        %960 = vrot.lane.b32.xlu0 %v957, 1
        %v961 = vpop.permute.xlu0 %960
        %v963 = vsel %vm885, inf, %v961
        %v964 = vmin.f32 %v963, %v957
        %v965 = vadd.f32 %v958, %v964
        %s966 = scalar_lea.vmem [#allocation2], 8
        %v967 = vld [vmem:[%s966] sm:$0x3f]
        %969 = vrot.lane.b32.xlu0 %v965, 1
        %v970 = vpop.permute.xlu0 %969
        %v972 = vsel %vm885, inf, %v970
        %v973 = vmin.f32 %v972, %v965
        %v974 = vadd.f32 %v967, %v973
        %s975 = scalar_lea.vmem [#allocation2], 16
        %v976 = vld [vmem:[%s975] sm:$0x3f]
        %978 = vrot.lane.b32.xlu0 %v974, 1
        %v979 = vpop.permute.xlu0 %978
        %v981 = vsel %vm885, inf, %v979
        %v982 = vmin.f32 %v981, %v974
        %v983 = vadd.f32 %v976, %v982
        %s984 = scalar_lea.vmem [#allocation2], 24
        %v985 = vld [vmem:[%s984] sm:$0x3f]
        %987 = vrot.lane.b32.xlu0 %v983, 1
        %v988 = vpop.permute.xlu0 %987
        %v990 = vsel %vm885, inf, %v988
        %v991 = vmin.f32 %v990, %v983
        %v992 = vadd.f32 %v985, %v991
        %s993 = scalar_lea.vmem [#allocation2], 32
        %v994 = vld [vmem:[%s993] sm:$0x3f]
        %996 = vrot.lane.b32.xlu0 %v992, 1
        %v997 = vpop.permute.xlu0 %996
        %v999 = vsel %vm885, inf, %v997
        %v1000 = vmin.f32 %v999, %v992
        %v1001 = vadd.f32 %v994, %v1000
        %s1002 = scalar_lea.vmem [#allocation2], 40
        %v1003 = vld [vmem:[%s1002] sm:$0x3f]
        %1005 = vrot.lane.b32.xlu0 %v1001, 1
        %v1006 = vpop.permute.xlu0 %1005
        %v1008 = vsel %vm885, inf, %v1006
        %v1009 = vmin.f32 %v1008, %v1001
        %v1010 = vadd.f32 %v1003, %v1009
        %s1011 = scalar_lea.vmem [#allocation2], 48
        %v1012 = vld [vmem:[%s1011] sm:$0x3f]
        %1014 = vrot.lane.b32.xlu0 %v1010, 1
        %v1015 = vpop.permute.xlu0 %1014
        %v1017 = vsel %vm885, inf, %v1015
        %v1018 = vmin.f32 %v1017, %v1010
        %v1019 = vadd.f32 %v1012, %v1018
        %s1020 = scalar_lea.vmem [#allocation2], 56
        %v1021 = vld [vmem:[%s1020] sm:$0x3f]
        %1023 = vrot.lane.b32.xlu0 %v1019, 1
        %v1024 = vpop.permute.xlu0 %1023
        %v1026 = vsel %vm885, inf, %v1024
        %v1027 = vmin.f32 %v1026, %v1019
        %v1028 = vadd.f32 %v1021, %v1027
        %v1029 = vsub.f32 0.0, %v1028
        %vm1030 = vcmask 62520
        %v1031 = vsel %vm1030, %v1029, -inf
        %v1032 = vrot.slane %v1031, 4
        %v1033 = vmax.f32 %v1031, %v1032
        %v1034 = vrot.slane %v1033, 2
        %v1035 = vmax.f32 %v1033, %v1034
        %v1036 = vrot.slane %v1035, 1
        %v1037 = vmax.f32 %v1035, %v1036
        %v1038 = vsub.f32 %v1029, %v1037
        %v1039 = vmul.f32 %v1038, 1.442695
        %v1040 = vpow.pop %v1039
        %v1041 = vsel %vm1030, %v1040, 0.0
        %v1042 = vrot.slane %v1041, 4
        %v1043 = vadd.f32 %v1041, %v1042
        %v1044 = vrot.slane %v1043, 2
        %v1045 = vadd.f32 %v1043, %v1044
        %v1046 = vrot.slane %v1045, 1
        %v1047 = vadd.f32 %v1045, %v1046
        %v1048 = vrcp.pop %v1047
        %v1049 = vmul.f32 %v1040, %v1048
        %vm1050 = vcmask 59448
        %v1051 = vsel %vm1050, %v1049, 0.0
        %v1052 = vrot.slane %v1051, 4
        %v1053 = vadd.f32 %v1051, %v1052
        %v1054 = vrot.slane %v1053, 2
        %v1055 = vadd.f32 %v1053, %v1054
        %v1056 = vrot.slane %v1055, 1
        %v1057 = vadd.f32 %v1055, %v1056
        %v1059 = vrot.slane %v1049, 3
        %v1061 = vsel %vm1050, %v1059, 0.0
        %v1062 = vrot.slane %v1061, 4
        %v1063 = vadd.f32 %v1061, %v1062
        %v1064 = vrot.slane %v1063, 2
        %v1065 = vadd.f32 %v1063, %v1064
        %v1066 = vrot.slane %v1065, 1
        %v1067 = vadd.f32 %v1065, %v1066
        %1069 = vrot.lane.b32.xlu0 %v1057, 121
        %v1070 = vpop.permute.xlu0 %1069
        %1073 = vrot.lane.b32.xlu0 %v1067, 122
        %v1074 = vpop.permute.xlu0 %1073
        %v1076 = vsel %vm885, %v1070, %v1074
        %v1077 = vsel %vm894, %v1076, 0.0
        %1078 = vst [vmem:[%s202] sm:$0x1] %v1077
        %s1079 = sand.u32 %s116, 1
        %s1080 = scalar_lea.sflag [#allocation5], %s1079
        %s1081 = sand.u32 %s116, 1
        %s1082 = scalar_lea.vmem [#allocation6], %s1081
        // Predicated region
        $region41: #{tpu_custom_call.1} parent=35 // pred_check
          %p1083 = pneg %p126
        $region42: #{tpu_custom_call.1} parent=35 // pred_check_branch
          %1085 = sbr.rel (%p1083) target = $region44
        $region43: #{tpu_custom_call.1} parent=35 // pred_region
          %1087 = vsyncadd %s1080, 0
          %s1088 = scalar_lea.hbm %s4, %s19
          %s1090 = sshll.u32 %s1082, 4
          %s1091 = int_to_ptr.vmem [resolvable:$true] %s1090
          %s1092 = sshll.u32 %s1088, 4
          %s1093 = int_to_ptr.hbm [resolvable:$true] %s1092
          %1095 = dma.vmem_to_hbm [thread:$0]  %s1091, 16, %s1093, %s1080
        $region44: #{tpu_custom_call.1} parent=35 // pred_fallthru
          _
      $region36: #{tpu_custom_call.1} parent=5 // pred_fallthru
        _
      %p1096 = scmp.le.s32.totalorder 2, %s14
      // Predicated region
      $region45: #{tpu_custom_call.1} parent=5 // pred_check
        %p1097 = pneg %p1096
      $region46: #{tpu_custom_call.1} parent=5 // pred_check_branch
        %1099 = sbr.rel (%p1097) target = $region48
      $region47: #{tpu_custom_call.1} parent=5 // pred_region
        %s1100 = ssub.s32 %s14, 2
        // Predicated region
        $region49: #{tpu_custom_call.1} parent=47 // pred_check
          %p1101 = pneg %p132
        $region50: #{tpu_custom_call.1} parent=47 // pred_check_branch
          %1103 = sbr.rel (%p1101) target = $region52
        $region51: #{tpu_custom_call.1} parent=47 // pred_region
          %s1104 = sand.u32 %s117, 1
          %s1105 = scalar_lea.sflag [#allocation5], %s1104
          %s1106 = sand.u32 %s117, 1
          %s1107 = scalar_lea.vmem [#allocation6], %s1106
          %1109 = dma.done %s1105, 16
        $region52: #{tpu_custom_call.1} parent=47 // pred_fallthru
          _
      $region48: #{tpu_custom_call.1} parent=5 // pred_fallthru
        _
    $region6: #{tpu_custom_call.1} parent=1 // loop_footer
      %s18 = sadd.s32 1, %s14
    $region7: #{tpu_custom_call.1} parent=1 // loop_footer_branch
      %13 = sbr.rel target = $region3
    $region8: #{tpu_custom_call.1} parent=1 // loop_exit
      _
    %1110 = vsyncpa [#allocation4], 1
    %s1111 = scalar_lea.sflag [#allocation4], 1
    %1112 = vsyncpa %s1111, 1
    %1113 = vsyncpa [#allocation5], 1
    %s1114 = scalar_lea.sflag [#allocation5], 1
    %1115 = vsyncpa %s1114, 1

</llo_original>
